<compile_context>
chip_gen: v5e
topology: v5e:2x2
jax: 0.10.0
libtpu: 0.0.40
codegen_flags: <defaults>
</compile_context>

<pallas_src>
import functools

import jax
import jax.numpy as jnp
from jax.experimental import pallas as pl
from jax.experimental.pallas import tpu as pltpu


def _chained_residuals_kernel(w_ref, pred_ref, target_ref, out_ref, *, inv_d):
    """One row-tile of both chained residual terms, stored stacked.

    w_ref      : (2,)        SMEM  -- [w_data, w_smooth] (f32)
    pred_ref   : (tm, D)     VMEM tile
    target_ref : (tm, D)     VMEM tile
    out_ref    : (2, tm, D)  VMEM tile -- out[0] = data term, out[1] = smooth term
    """
    dtype = pred_ref.dtype

    # Load each input tile exactly once; both terms reuse `pred`.
    pred = pred_ref[...]
    target = target_ref[...]

    w_data = w_ref[0]
    w_smooth = w_ref[1]

    # residual 1: data term in the NATIVE dtype (bf16-capable VALU on v6e/v7x;
    # Mosaic inserts the converts on v5e). Halves vreg/VMEM intermediates for
    # sub-32-bit inputs; exact for f32 inputs.
    out_ref[0, :, :] = (w_data.astype(dtype) * (pred - target)).astype(out_ref.dtype)

    # residual 2: zero-mean (smoothness-style) term. Keep the lane-axis
    # reduction / mean path in f32 for accuracy; 1/D is a compile-time constant
    # so no divide sits on the VPU critical path (XLU does the lane-sum).
    pred_f32 = pred.astype(jnp.float32)
    row_mean = jnp.sum(pred_f32, axis=-1, keepdims=True) * inv_d
    out_ref[1, :, :] = (w_smooth * (pred_f32 - row_mean)).astype(out_ref.dtype)
    # NOTE: two stores per loaded (pred, target) pair -- fine even on v5e's
    # single vst slot since the kernel is HBM-DMA bound; do not add a third
    # output pass here.


def _vmem_budget_and_limit():
    """Generation-aware VMEM budget for pipeline buffers + compiler limit."""
    try:
        cap = int(pltpu.get_tpu_info().vmem_capacity_bytes)
    except Exception:  # query unavailable -> assume the smallest (v7x: 64 MiB/TC)
        cap = 64 << 20
    # Use at most ~half of physical VMEM for our double-buffered tiles, leaving
    # headroom for compiler-internal scratch, retiling copies and vreg spill.
    budget = max(8 << 20, min(cap // 2, 48 << 20))
    # Scoped-VMEM limit slightly above the working set the tiling assumes.
    limit = min(cap - (8 << 20), budget + (8 << 20))
    return budget, int(limit)


def _pick_row_tile(n, d, itemsize, budget_bytes):
    """Largest useful sublane-aligned row tile for an HBM-bound streaming kernel.

    Per-row VMEM footprint:
      * 2 input tiles + the stacked 2-term output tile, each double-buffered by
        the pipeline                          -> (2 + 2) * 2 * d * itemsize
      * ~3 f32 rows of live compute temporaries (pred upcast, centered term,
        product) that the pipeline estimate does not cover -> 12 * d
    Block-size targets:
      * >= ~1 MiB per input tile to amortize the ~0.35 us per-grid-step overhead
        (the budget/8 bound below guarantees this whenever n is large enough)
      * <= ~4 MiB so large problems keep multiple grid steps for pipelining and
        v7x megacore sharding.
    """
    bytes_per_row = 8 * d * itemsize + 12 * d
    tm_budget = max(1, budget_bytes // bytes_per_row)
    rows_4mb = -(-(4 << 20) // (d * itemsize))
    tm = min(tm_budget, n, rows_4mb)

    # If everything fits one tile but the data is >= ~2 MiB, split into >= 2
    # grid steps (each half still >= ~1 MiB) so megacore/pipelining engage.
    if tm == n and n * d * itemsize >= (2 << 20):
        tm = -(-n // 2)

    if n >= 8:
        tm = max(8, (tm // 8) * 8)   # keep the sublane dim 8-aligned
    else:
        tm = n                        # full-extent block is always legal
    return tm


class ChainedResidualsPallas:
    """JAX/Pallas mirror of ChainedResiduals (+ Residuals.step)."""

    def __init__(self, chain=None, pallas_min_bytes=256 * 1024):
        # chain: ordered dict name -> weight (synthetic concrete residual terms)
        self.chain = chain if chain is not None else {"data": 1.0, "smooth": 0.5}
        # Inputs smaller than this (total bytes) use the fused pure-jnp path:
        # a single tiny tile is dominated by pallas_call launch overhead and
        # XLA fuses this elementwise+reduce pattern well.
        self.pallas_min_bytes = pallas_min_bytes
        # TODO(synk): base-class Residuals.forward is abstract in PyTorch; the
        # concrete residual terms here are synthetic but deterministic.

    @property
    def names(self):
        return list(self.chain.keys())

    # ---- fused pure-jnp fallback (same math as the kernel) -----------------
    def _forward_jnp(self, pred, target):
        d = pred.shape[-1]
        w_data = jnp.float32(float(self.chain["data"]))
        w_smooth = jnp.float32(float(self.chain["smooth"]))
        data = (w_data.astype(pred.dtype) * (pred - target)).astype(pred.dtype)
        pred_f32 = pred.astype(jnp.float32)
        mean = jnp.sum(pred_f32, axis=-1, keepdims=True) * (1.0 / d)
        smooth = (w_smooth * (pred_f32 - mean)).astype(pred.dtype)
        return jnp.stack([data, smooth], axis=0)

    # ---- fused Pallas forward ----------------------------------------------
    def forward(self, pred, target):
        """Returns the stacked residual slab (num_terms, N, D) from one fused
        Pallas kernel. reshape(-1) of it equals cat(residuals).reshape(-1)."""
        n, d = pred.shape
        num_terms = len(self.chain)
        assert num_terms == 2, "synthetic chain has exactly two terms"

        itemsize = jnp.dtype(pred.dtype).itemsize
        if 2 * n * d * itemsize < self.pallas_min_bytes:
            return self._forward_jnp(pred, target)

        # Weights live in SMEM -> changing them does NOT recompile the kernel.
        weights = jnp.asarray(
            [float(self.chain["data"]), float(self.chain["smooth"])],
            dtype=jnp.float32,
        )

        budget, vmem_limit = _vmem_budget_and_limit()
        tm = _pick_row_tile(n, d, itemsize, budget)
        grid = (pl.cdiv(n, tm),)

        kernel = functools.partial(_chained_residuals_kernel, inv_d=1.0 / d)

        out = pl.pallas_call(
            kernel,
            out_shape=jax.ShapeDtypeStruct((num_terms, n, d), pred.dtype),
            grid=grid,
            in_specs=[
                # weights: whole (2,) array resident in SMEM (not pipelined,
                # never used in an index_map -> equivalent to scalar prefetch)
                pl.BlockSpec(memory_space=pltpu.MemorySpace.SMEM),
                pl.BlockSpec((tm, d), lambda i: (i, 0)),   # pred row tile
                pl.BlockSpec((tm, d), lambda i: (i, 0)),   # target row tile
            ],
            # Stacked output: each grid step writes two contiguous tm*D slabs
            # (offsets i*tm*D and N*D + i*tm*D) -> lane-dense writeback, and
            # reshape(-1) of the result is a bitcast.
            # TODO(synk): confirm in the MLIR dump that the per-step output DMA
            # stays two contiguous slabs; if it ever turns row-strided, split
            # into a tuple of two outputs with identical row index maps.
            out_specs=pl.BlockSpec((num_terms, tm, d), lambda i: (0, i, 0)),
            compiler_params=pltpu.CompilerParams(
                # Row tiles are independent -> shard across v7x's two TCs.
                dimension_semantics=("parallel",),
                vmem_limit_bytes=vmem_limit,
            ),
        )(weights, pred, target)
        return out

    def step(self, pred, target):
        """Mirrors Residuals.step: F = cat(residuals).reshape(-1), info dict."""
        out = self.forward(pred, target)          # (num_terms, N, D)
        # cat(residuals, dim=0).reshape(-1) == stacked-slab.reshape(-1) (no copy).
        F = out.reshape(-1)
        # NOTE: out[i] lowers to an XLA slice (one device copy per term) -- this
        # mirrors the module returning separate tensors in the info dict.
        info = {name: out[i] for i, name in enumerate(self.names)}
        return F, info


if __name__ == "__main__":
    key = jax.random.PRNGKey(0)
    k_pred, k_target = jax.random.split(key)

    # NCHW input consistent with typical residual inputs
    x_nchw = jax.random.normal(k_pred, (2, 4, 16, 16), dtype=jnp.float32)
    t_nchw = jax.random.normal(k_target, (2, 4, 16, 16), dtype=jnp.float32)

    # layout: flatten NCHW -> [N*C, H*W] = [8, 256] (lanes = H*W)
    pred = x_nchw.reshape(2 * 4, 16 * 16)
    target = t_nchw.reshape(2 * 4, 16 * 16)

    # Force the Pallas path for this tiny demo shape (a production default of
    # pallas_min_bytes=256 KiB would route it to the fused-jnp fast path).
    module = ChainedResidualsPallas({"data": 1.0, "smooth": 0.5}, pallas_min_bytes=0)
    F, info = module.step(pred, target)
    F = jax.block_until_ready(F)

    # Pure-JAX reference check (Residuals.step semantics)
    r_data_ref = 1.0 * (pred - target)
    r_smooth_ref = 0.5 * (pred - jnp.mean(pred, axis=-1, keepdims=True))
    F_ref = jnp.concatenate([r_data_ref, r_smooth_ref], axis=0).reshape(-1)

    assert F.shape == (2 * 8 * 256,)
    assert info["data"].shape == (8, 256) and info["smooth"].shape == (8, 256)
    assert jnp.allclose(F, F_ref, atol=1e-5, rtol=1e-5)
    assert jnp.allclose(info["data"], r_data_ref, atol=1e-5, rtol=1e-5)
    assert jnp.allclose(info["smooth"], r_smooth_ref, atol=1e-5, rtol=1e-5)

    # Second check: enough rows that the tile sizer produces a multi-step grid
    # (exercises the row index maps, the stacked-output writeback across steps,
    # and the >=2-grid-steps split used for pipelining / v7x megacore).
    k2, k3 = jax.random.split(jax.random.PRNGKey(1))
    pred_big = jax.random.normal(k2, (2048, 256), dtype=jnp.float32)
    target_big = jax.random.normal(k3, (2048, 256), dtype=jnp.float32)
    F_big, _ = module.step(pred_big, target_big)
    F_big = jax.block_until_ready(F_big)
    data_big_ref = 1.0 * (pred_big - target_big)
    smooth_big_ref = 0.5 * (pred_big - jnp.mean(pred_big, axis=-1, keepdims=True))
    F_big_ref = jnp.concatenate([data_big_ref, smooth_big_ref], axis=0).reshape(-1)
    assert jnp.allclose(F_big, F_big_ref, atol=1e-5, rtol=1e-5)

    print("KERNEL_OK")
</pallas_src>

<mosaic_0001>
module attributes {stable_mosaic.version = 11 : i64} {
  func.func @_chained_residuals_kernel(%arg0: i32, %arg1: memref<2xf32, #tpu.memory_space<smem>>, %arg2: memref<8x256xf32, #tpu.memory_space<vmem>>, %arg3: memref<8x256xf32, #tpu.memory_space<vmem>>, %arg4: memref<2x8x256xf32, #tpu.memory_space<vmem>>) attributes {dimension_semantics = [#tpu.dimension_semantics<parallel>], iteration_bounds = array<i64: 1>, scalar_prefetch = 0 : i64, scratch_operands = 0 : i64, tpu.core_type = #tpu.core_type<tc>, window_params = [{transform_indices = @transform_0, window_bounds = array<i64: 2>}, {transform_indices = @transform_1, window_bounds = array<i64: 8, 256>}, {transform_indices = @transform_2, window_bounds = array<i64: 8, 256>}, {transform_indices = @transform_3, window_bounds = array<i64: 2, 8, 256>}]} {
    %c0 = arith.constant 0 : index
    %c0_0 = arith.constant 0 : index
    %0 = vector.load %arg2[%c0, %c0_0] : memref<8x256xf32, #tpu.memory_space<vmem>>, vector<8x256xf32>
    %c0_1 = arith.constant 0 : index
    %c0_2 = arith.constant 0 : index
    %1 = vector.load %arg3[%c0_1, %c0_2] : memref<8x256xf32, #tpu.memory_space<vmem>>, vector<8x256xf32>
    %c0_3 = arith.constant 0 : index
    %2 = memref.load %arg1[%c0_3] : memref<2xf32, #tpu.memory_space<smem>>
    %c1 = arith.constant 1 : index
    %3 = memref.load %arg1[%c1] : memref<2xf32, #tpu.memory_space<smem>>
    %4 = arith.subf %0, %1 : vector<8x256xf32>
    %5 = vector.broadcast %2 : f32 to vector<8x256xf32>
    %6 = arith.mulf %5, %4 : vector<8x256xf32>
    %c0_4 = arith.constant 0 : index
    %c0_5 = arith.constant 0 : index
    %c0_6 = arith.constant 0 : index
    %7 = vector.load %arg4[%c0_4, %c0_5, %c0_6] : memref<2x8x256xf32, #tpu.memory_space<vmem>>, vector<1x8x256xf32>
    %8 = vector.shape_cast %7 : vector<1x8x256xf32> to vector<8x256xf32>
    %9 = vector.shape_cast %6 : vector<8x256xf32> to vector<1x8x256xf32>
    tpu.vector_store %arg4[%c0_4, %c0_5, %c0_6], %9 {strides = array<i32>} : memref<2x8x256xf32, #tpu.memory_space<vmem>>, vector<1x8x256xf32>,
    %cst = arith.constant dense<0.000000e+00> : vector<8xf32>
    %10 = vector.multi_reduction <add>, %0, %cst [1] : vector<8x256xf32> to vector<8xf32>
    %11 = vector.shape_cast %10 : vector<8xf32> to vector<8x1xf32>
    %cst_7 = arith.constant 3.906250e-03 : f32
    %12 = vector.broadcast %cst_7 : f32 to vector<8x1xf32>
    %13 = arith.mulf %11, %12 : vector<8x1xf32>
    %14 = vector.broadcast %13 : vector<8x1xf32> to vector<8x256xf32>
    %15 = arith.subf %0, %14 : vector<8x256xf32>
    %16 = vector.broadcast %3 : f32 to vector<8x256xf32>
    %17 = arith.mulf %16, %15 : vector<8x256xf32>
    %c1_8 = arith.constant 1 : index
    %c0_9 = arith.constant 0 : index
    %c0_10 = arith.constant 0 : index
    %18 = vector.load %arg4[%c1_8, %c0_9, %c0_10] : memref<2x8x256xf32, #tpu.memory_space<vmem>>, vector<1x8x256xf32>
    %19 = vector.shape_cast %18 : vector<1x8x256xf32> to vector<8x256xf32>
    %20 = vector.shape_cast %17 : vector<8x256xf32> to vector<1x8x256xf32>
    tpu.vector_store %arg4[%c1_8, %c0_9, %c0_10], %20 {strides = array<i32>} : memref<2x8x256xf32, #tpu.memory_space<vmem>>, vector<1x8x256xf32>,
    return
  }
  func.func @transform_0(%arg0: i32) -> i32 {
    %c0_i32 = arith.constant 0 : i32
    %c0_i32_0 = arith.constant 0 : i32
    return %c0_i32 : i32
  }
  func.func @transform_1(%arg0: i32) -> (i32, i32) {
    %c0_i32 = arith.constant 0 : i32
    %c0_i32_0 = arith.constant 0 : i32
    return %arg0, %c0_i32 : i32, i32
  }
  func.func @transform_2(%arg0: i32) -> (i32, i32) {
    %c0_i32 = arith.constant 0 : i32
    %c0_i32_0 = arith.constant 0 : i32
    return %arg0, %c0_i32 : i32, i32
  }
  func.func @transform_3(%arg0: i32) -> (i32, i32, i32) {
    %c0_i32 = arith.constant 0 : i32
    %c0_i32_0 = arith.constant 0 : i32
    %c0_i32_1 = arith.constant 0 : i32
    return %c0_i32, %arg0, %c0_i32_0 : i32, i32, i32
  }
}

</mosaic_0001>

<llo_original>
// kernel: tpu_custom_call.1
$region0: #{tpu_custom_call.1}
  #allocation0 [shape = 'u32[]', space=smem, size = 0x4, offset = 0x4, fixed_abs, tag = 'smem constant byte address 0x4 - core index']
  #allocation1 [shape = 'u32[72,128]{1,0:T(1,128)}', space=vmem, size = 0x9000, scoped, tag = 'internal scratch']
  %s0 = inlined_call_operand.hbm [shape: f32[2], index: 0, kind: input, shape index: {}]
  %s1 = inlined_call_operand.hbm [shape: f32[8,256], index: 1, kind: input, shape index: {}]
  %s2 = inlined_call_operand.hbm [shape: f32[8,256], index: 2, kind: input, shape index: {}]
  %s3 = inlined_call_operand.hbm [shape: f32[2,8,256], index: 3, kind: output, shape index: {}]
  %s4 = sld [smem:[#allocation0]]
  $region34: #{tpu_custom_call.1} parent=0
    _
  %s6 = ssub.s32 1, %s4
  %s7 = scalar_select 0, %s6, %s4
  $region1: #{tpu_custom_call.1} parent=0
    #allocation2 [shape = 'u8[512]{0}', space=smem, size = 0x200, scoped, tag = 'input window, operand 0, single buffered']
    #allocation3 [shape = 's32[1]{0}', space=sflag, size = 0x4, scoped, tag = 'scoped memory for tpu_custom_call.1']
    #allocation4 [shape = 's32[1]{0}', space=sflag, size = 0x4, scoped, tag = 'scoped memory for tpu_custom_call.1']
    #allocation5 [shape = 's32[1]{0}', space=sflag, size = 0x4, scoped, tag = 'scoped memory for tpu_custom_call.1']
    #allocation6 [shape = 'u8[8192]{0}', space=vmem, size = 0x2000, scoped, tag = 'input window, operand 1, single buffered']
    #allocation7 [shape = 'u8[8192]{0}', space=vmem, size = 0x2000, scoped, tag = 'input window, operand 2, single buffered']
    #allocation8 [shape = 's32[1]{0}', space=sflag, size = 0x4, scoped, tag = 'scoped memory for tpu_custom_call.1']
    #allocation9 [shape = 'u8[16384]{0}', space=vmem, size = 0x4000, scoped, tag = 'output window, operand 0, single buffered']
    %8 = vsyncpa [#allocation5], 0
    %9 = vsyncpa [#allocation3], 0
    %10 = vsyncpa [#allocation8], 0
    %11 = vsyncpa [#allocation4], 0
    // Predicated region
    $region2: #{tpu_custom_call.1} parent=1 // pred_check
      _
    $region3: #{tpu_custom_call.1} parent=1 // pred_check_branch
      %13 = sbr.rel (0) target = $region5
    $region4: #{tpu_custom_call.1} parent=1 // pred_region
      %15 = vsyncadd [#allocation5], 0
      %s17 = sshll.u32 %s0, 4
      %s18 = int_to_ptr.hbm [resolvable:$true] %s17
      %20 = dma.hbm_to_smem %s18, 16, [#allocation2], [#allocation5]
    $region5: #{tpu_custom_call.1} parent=1 // pred_fallthru
      _
    // Predicated region
    $region6: #{tpu_custom_call.1} parent=1 // pred_check
      _
    $region7: #{tpu_custom_call.1} parent=1 // pred_check_branch
      %22 = sbr.rel (0) target = $region9
    $region8: #{tpu_custom_call.1} parent=1 // pred_region
      %24 = vsyncadd [#allocation3], 0
      %s26 = sshll.u32 %s1, 4
      %s27 = int_to_ptr.hbm [resolvable:$true] %s26
      %s28 = sshll.u32 [#allocation6], 4
      %s29 = int_to_ptr.vmem [resolvable:$true] %s28
      %31 = dma.hbm_to_vmem [thread:$0]  %s27, 256, %s29, [#allocation3]
    $region9: #{tpu_custom_call.1} parent=1 // pred_fallthru
      _
    // Predicated region
    $region10: #{tpu_custom_call.1} parent=1 // pred_check
      _
    $region11: #{tpu_custom_call.1} parent=1 // pred_check_branch
      %33 = sbr.rel (0) target = $region13
    $region12: #{tpu_custom_call.1} parent=1 // pred_region
      %35 = vsyncadd [#allocation8], 0
      %s37 = sshll.u32 %s2, 4
      %s38 = int_to_ptr.hbm [resolvable:$true] %s37
      %s39 = sshll.u32 [#allocation7], 4
      %s40 = int_to_ptr.vmem [resolvable:$true] %s39
      %42 = dma.hbm_to_vmem [thread:$0]  %s38, 256, %s40, [#allocation8]
    $region13: #{tpu_custom_call.1} parent=1 // pred_fallthru
      _
    // Predicated region
    $region14: #{tpu_custom_call.1} parent=1 // pred_check
      _
    $region15: #{tpu_custom_call.1} parent=1 // pred_check_branch
      %44 = sbr.rel (0) target = $region17
    $region16: #{tpu_custom_call.1} parent=1 // pred_region
      %46 = dma.done [#allocation5], 16
    $region17: #{tpu_custom_call.1} parent=1 // pred_fallthru
      _
    // Predicated region
    $region18: #{tpu_custom_call.1} parent=1 // pred_check
      _
    $region19: #{tpu_custom_call.1} parent=1 // pred_check_branch
      %48 = sbr.rel (0) target = $region21
    $region20: #{tpu_custom_call.1} parent=1 // pred_region
      %50 = dma.done [#allocation3], 256
    $region21: #{tpu_custom_call.1} parent=1 // pred_fallthru
      _
    // Predicated region
    $region22: #{tpu_custom_call.1} parent=1 // pred_check
      _
    $region23: #{tpu_custom_call.1} parent=1 // pred_check_branch
      %52 = sbr.rel (0) target = $region25
    $region24: #{tpu_custom_call.1} parent=1 // pred_region
      %54 = dma.done [#allocation8], 256
    $region25: #{tpu_custom_call.1} parent=1 // pred_fallthru
      _
    %55 = sfence
    %v56 = vld [vmem:[#allocation6] sm:$0xff]
    %v57 = vld [vmem:[#allocation6 + $0x8] sm:$0xff]
    %v58 = vld [vmem:[#allocation7] sm:$0xff]
    %v59 = vld [vmem:[#allocation7 + $0x8] sm:$0xff]
    %s60 = sld [smem:[#allocation2]]
    %s61 = sld [smem:[#allocation2 + $0x1]]
    %v62 = vsub.f32 %v56, %v58
    %v63 = vsub.f32 %v57, %v59
    %v64 = vstv %s60
    %v65 = vmul.f32 %v64, %v62
    %v66 = vmul.f32 %v64, %v63
    %67 = vst [vmem:[#allocation9] sm:$0xff] %v65
    %68 = vst [vmem:[#allocation9 + $0x8] sm:$0xff] %v66
    %v69 = vadd.f32 %v56, %v57
    %70 = vadd.xlane.f32.xlu0 %v69
    %v71 = vpop.xlane.xlu0 %70
    %v72 = vmul.f32 %v71, 0.00390625
    %v73 = vsub.f32 %v56, %v72
    %v74 = vsub.f32 %v57, %v72
    %v75 = vstv %s61
    %v76 = vmul.f32 %v75, %v73
    %v77 = vmul.f32 %v75, %v74
    %s78 = scalar_lea.vmem [#allocation9], 16
    %79 = vst [vmem:[%s78] sm:$0xff] %v76
    %80 = vst [vmem:[%s78 + $0x8] sm:$0xff] %v77
    // Predicated region
    $region26: #{tpu_custom_call.1} parent=1 // pred_check
      _
    $region27: #{tpu_custom_call.1} parent=1 // pred_check_branch
      %82 = sbr.rel (0) target = $region29
    $region28: #{tpu_custom_call.1} parent=1 // pred_region
      %84 = vsyncadd [#allocation4], 0
      %s85 = sshll.u32 [#allocation9], 4
      %s86 = int_to_ptr.vmem [resolvable:$true] %s85
      %s87 = sshll.u32 %s3, 4
      %s88 = int_to_ptr.hbm [resolvable:$true] %s87
      %93 = dma.vmem_to_hbm [thread:$0]  %s86, 512, %s88, [#allocation4], 256, 256, 16
    $region29: #{tpu_custom_call.1} parent=1 // pred_fallthru
      _
    // Predicated region
    $region30: #{tpu_custom_call.1} parent=1 // pred_check
      _
    $region31: #{tpu_custom_call.1} parent=1 // pred_check_branch
      %95 = sbr.rel (0) target = $region33
    $region32: #{tpu_custom_call.1} parent=1 // pred_region
      %97 = dma.done [#allocation4], 512
    $region33: #{tpu_custom_call.1} parent=1 // pred_fallthru
      _
    %98 = vsyncpa [#allocation3], 1
    %99 = vsyncpa [#allocation8], 1
    %100 = vsyncpa [#allocation4], 1
    %101 = vsyncpa [#allocation5], 1

</llo_original>
